<compile_context>
chip_gen: v6e
topology: v6e:2x2x1
jax: 0.10.0
libtpu: 0.0.40
codegen_flags: <defaults>
</compile_context>

<pallas_src>
import jax
import jax.numpy as jnp
from jax.experimental import pallas as pl
from jax.experimental.pallas import tpu as pltpu


def _round_up(n, m):
    return ((n + m - 1) // m) * m


def pg_kernel(x_ref, w1_ref, b1_ref, w2_ref, b2_ref, w3_ref, b3_ref, o_ref):
    x = x_ref[...]                                                     # (4, TB)

    # layer 1: (24,4) @ (4,TB) + (24,1) -> relu
    h1 = jnp.dot(w1_ref[...], x, preferred_element_type=jnp.float32)
    h1 = jnp.maximum(h1 + b1_ref[...], 0.0)                            # (24, TB)

    # layer 2: (36,24) @ (24,TB) + (36,1) -> relu
    h2 = jnp.dot(w2_ref[...], h1, preferred_element_type=jnp.float32)
    h2 = jnp.maximum(h2 + b2_ref[...], 0.0)                            # (36, TB)

    # layer 3: (1,36) @ (36,TB) + (1,1) -> sigmoid, lane-dense (1, TB) store
    h3 = jnp.dot(w3_ref[...], h2, preferred_element_type=jnp.float32)
    o_ref[...] = jax.nn.sigmoid(h3 + b3_ref[...]).astype(o_ref.dtype)


def pg_forward(x, params, *, tb=512):
    """x: (B, 4) float32.  Returns (B, 1) float32, matching the PyTorch module."""
    w1, b1, w2, b2, w3, b3 = params
    B = x.shape[0]

    # batch-on-lanes layout + pad batch to a lane-aligned tile multiple.
    TB = min(tb, _round_up(B, 128))          # small inputs -> one 128-wide tile
    Bp = _round_up(B, TB)
    xt = x.T                                  # (4, B)
    if Bp != B:
        xt = jnp.pad(xt, ((0, 0), (0, Bp - B)))

    # biases as 2-D (out, 1) columns -> broadcast along lanes for free.
    b1c = b1.reshape(-1, 1)
    b2c = b2.reshape(-1, 1)
    b3c = b3.reshape(-1, 1)

    grid = (Bp // TB,)

    resident = lambda shape: pl.BlockSpec(shape, lambda i: (0, 0))

    flops = 2 * Bp * (4 * 24 + 24 * 36 + 36 * 1)
    param_bytes = 4 * (w1.size + b1.size + w2.size + b2.size + w3.size + b3.size)
    cost = pl.CostEstimate(
        flops=flops,
        transcendentals=Bp,                                  # sigmoid exp per row
        bytes_accessed=4 * (Bp * 4 + Bp * 1) + param_bytes,
    )

    out = pl.pallas_call(
        pg_kernel,
        out_shape=jax.ShapeDtypeStruct((1, Bp), jnp.float32),
        grid=grid,
        in_specs=[
            pl.BlockSpec((4, TB), lambda i: (0, i)),         # x tile (batch-blocked)
            resident(w1.shape), resident(b1c.shape),
            resident(w2.shape), resident(b2c.shape),
            resident(w3.shape), resident(b3c.shape),
        ],
        out_specs=pl.BlockSpec((1, TB), lambda i: (0, i)),   # lane-dense output
        compiler_params=pltpu.CompilerParams(
            dimension_semantics=("parallel",),               # 2 TCs on v7x
        ),
        cost_estimate=cost,
    )(xt, w1, b1c, w2, b2c, w3, b3c)

    return out[:, :B].T                                      # (B, 1)


def init_params(key):
    """Deterministic init mimicking PyTorch Linear default (U[-1/sqrt(fan_in), +])."""
    def linear(key, fan_in, fan_out):
        kw, kb = jax.random.split(key)
        bound = 1.0 / jnp.sqrt(fan_in)
        w = jax.random.uniform(kw, (fan_out, fan_in), jnp.float32, -bound, bound)
        b = jax.random.uniform(kb, (fan_out,), jnp.float32, -bound, bound)
        return w, b

    k1, k2, k3 = jax.random.split(key, 3)
    w1, b1 = linear(k1, 4, 24)
    w2, b2 = linear(k2, 24, 36)
    w3, b3 = linear(k3, 36, 1)
    return (w1, b1, w2, b2, w3, b3)


def pg_reference(x, params):
    w1, b1, w2, b2, w3, b3 = params
    h = jnp.maximum(x @ w1.T + b1, 0.0)
    h = jnp.maximum(h @ w2.T + b2, 0.0)
    return jax.nn.sigmoid(h @ w3.T + b3)


if __name__ == "__main__":
    key = jax.random.PRNGKey(0)
    kx, kp = jax.random.split(key)

    B = 8                                    # small batch of CartPole-like states
    x = jax.random.normal(kx, (B, 4), jnp.float32)
    params = init_params(kp)

    out = pg_forward(x, params)
    out = jax.block_until_ready(out)

    ref = pg_reference(x, params)
    assert out.shape == (B, 1)
    assert jnp.allclose(out, ref, atol=1e-5, rtol=1e-5)

    # also exercise a batch that spans multiple grid tiles with a ragged tail
    B2 = 1000
    x2 = jax.random.normal(kx, (B2, 4), jnp.float32)
    out2 = jax.block_until_ready(pg_forward(x2, params, tb=256))
    assert out2.shape == (B2, 1)
    assert jnp.allclose(out2, pg_reference(x2, params), atol=1e-5, rtol=1e-5)

    print("KERNEL_OK")
</pallas_src>

<mosaic_0001>
module attributes {stable_mosaic.version = 11 : i64} {
  func.func @pg_kernel(%arg0: i32, %arg1: memref<4x128xf32, #tpu.memory_space<vmem>>, %arg2: memref<24x4xf32, #tpu.memory_space<vmem>>, %arg3: memref<24x1xf32, #tpu.memory_space<vmem>>, %arg4: memref<36x24xf32, #tpu.memory_space<vmem>>, %arg5: memref<36x1xf32, #tpu.memory_space<vmem>>, %arg6: memref<1x36xf32, #tpu.memory_space<vmem>>, %arg7: memref<1x1xf32, #tpu.memory_space<vmem>>, %arg8: memref<1x128xf32, #tpu.memory_space<vmem>>) attributes {dimension_semantics = [#tpu.dimension_semantics<parallel>], iteration_bounds = array<i64: 1>, scalar_prefetch = 0 : i64, scratch_operands = 0 : i64, tpu.core_type = #tpu.core_type<tc>, window_params = [{transform_indices = @transform_0, window_bounds = array<i64: 4, 128>}, {pipeline_mode = #tpu.pipeline_mode<synchronous>, transform_indices = @transform_1, window_bounds = array<i64: 24, 4>}, {pipeline_mode = #tpu.pipeline_mode<synchronous>, transform_indices = @transform_2, window_bounds = array<i64: 24, 1>}, {pipeline_mode = #tpu.pipeline_mode<synchronous>, transform_indices = @transform_3, window_bounds = array<i64: 36, 24>}, {pipeline_mode = #tpu.pipeline_mode<synchronous>, transform_indices = @transform_4, window_bounds = array<i64: 36, 1>}, {pipeline_mode = #tpu.pipeline_mode<synchronous>, transform_indices = @transform_5, window_bounds = array<i64: 1, 36>}, {pipeline_mode = #tpu.pipeline_mode<synchronous>, transform_indices = @transform_6, window_bounds = array<i64: 1, 1>}, {transform_indices = @transform_7, window_bounds = array<i64: 1, 128>}]} {
    %c0 = arith.constant 0 : index
    %c0_0 = arith.constant 0 : index
    %0 = vector.load %arg1[%c0, %c0_0] : memref<4x128xf32, #tpu.memory_space<vmem>>, vector<4x128xf32>
    %c0_1 = arith.constant 0 : index
    %c0_2 = arith.constant 0 : index
    %1 = vector.load %arg2[%c0_1, %c0_2] : memref<24x4xf32, #tpu.memory_space<vmem>>, vector<24x4xf32>
    %cst = arith.constant dense<0.000000e+00> : vector<24x128xf32>
    %2 = tpu.matmul %1, %0, %cst {dimension_numbers = #tpu.dot_dimension_numbers<[1], [0], [0], [1], [0, 0, 1, 1], [], []>} : vector<24x4xf32>, vector<4x128xf32>, vector<24x128xf32> -> vector<24x128xf32>
    %c0_3 = arith.constant 0 : index
    %c0_4 = arith.constant 0 : index
    %3 = vector.load %arg3[%c0_3, %c0_4] : memref<24x1xf32, #tpu.memory_space<vmem>>, vector<24x1xf32>
    %4 = vector.broadcast %3 : vector<24x1xf32> to vector<24x128xf32>
    %5 = arith.addf %2, %4 : vector<24x128xf32>
    %cst_5 = arith.constant 0.000000e+00 : f32
    %6 = vector.broadcast %cst_5 : f32 to vector<24x128xf32>
    %7 = arith.maximumf %5, %6 : vector<24x128xf32>
    %c0_6 = arith.constant 0 : index
    %c0_7 = arith.constant 0 : index
    %8 = vector.load %arg4[%c0_6, %c0_7] : memref<36x24xf32, #tpu.memory_space<vmem>>, vector<36x24xf32>
    %cst_8 = arith.constant dense<0.000000e+00> : vector<36x128xf32>
    %9 = tpu.matmul %8, %7, %cst_8 {dimension_numbers = #tpu.dot_dimension_numbers<[1], [0], [0], [1], [0, 0, 1, 1], [], []>} : vector<36x24xf32>, vector<24x128xf32>, vector<36x128xf32> -> vector<36x128xf32>
    %c0_9 = arith.constant 0 : index
    %c0_10 = arith.constant 0 : index
    %10 = vector.load %arg5[%c0_9, %c0_10] : memref<36x1xf32, #tpu.memory_space<vmem>>, vector<36x1xf32>
    %11 = vector.broadcast %10 : vector<36x1xf32> to vector<36x128xf32>
    %12 = arith.addf %9, %11 : vector<36x128xf32>
    %cst_11 = arith.constant 0.000000e+00 : f32
    %13 = vector.broadcast %cst_11 : f32 to vector<36x128xf32>
    %14 = arith.maximumf %12, %13 : vector<36x128xf32>
    %c0_12 = arith.constant 0 : index
    %c0_13 = arith.constant 0 : index
    %15 = vector.load %arg6[%c0_12, %c0_13] : memref<1x36xf32, #tpu.memory_space<vmem>>, vector<1x36xf32>
    %cst_14 = arith.constant dense<0.000000e+00> : vector<1x128xf32>
    %16 = tpu.matmul %15, %14, %cst_14 {dimension_numbers = #tpu.dot_dimension_numbers<[1], [0], [0], [1], [0, 0, 1, 1], [], []>} : vector<1x36xf32>, vector<36x128xf32>, vector<1x128xf32> -> vector<1x128xf32>
    %c0_15 = arith.constant 0 : index
    %c0_16 = arith.constant 0 : index
    %17 = vector.load %arg7[%c0_15, %c0_16] : memref<1x1xf32, #tpu.memory_space<vmem>>, vector<1x1xf32>
    %18 = vector.broadcast %17 : vector<1x1xf32> to vector<1x128xf32>
    %19 = arith.addf %16, %18 : vector<1x128xf32>
    %20 = arith.negf %19 : vector<1x128xf32>
    %21 = math.exp %20 : vector<1x128xf32>
    %cst_17 = arith.constant 1.000000e+00 : f32
    %22 = vector.broadcast %cst_17 : f32 to vector<1x128xf32>
    %23 = arith.addf %22, %21 : vector<1x128xf32>
    %24 = arith.divf %22, %23 : vector<1x128xf32>
    %c0_18 = arith.constant 0 : index
    %c0_19 = arith.constant 0 : index
    %25 = vector.load %arg8[%c0_18, %c0_19] : memref<1x128xf32, #tpu.memory_space<vmem>>, vector<1x128xf32>
    tpu.vector_store %arg8[%c0_18, %c0_19], %24 {strides = array<i32>} : memref<1x128xf32, #tpu.memory_space<vmem>>, vector<1x128xf32>,
    return
  }
  func.func @transform_0(%arg0: i32) -> (i32, i32) {
    %c0_i32 = arith.constant 0 : i32
    %c0_i32_0 = arith.constant 0 : i32
    return %c0_i32, %arg0 : i32, i32
  }
  func.func @transform_1(%arg0: i32) -> (i32, i32) {
    %c0_i32 = arith.constant 0 : i32
    %c0_i32_0 = arith.constant 0 : i32
    %c0_i32_1 = arith.constant 0 : i32
    return %c0_i32, %c0_i32_0 : i32, i32
  }
  func.func @transform_2(%arg0: i32) -> (i32, i32) {
    %c0_i32 = arith.constant 0 : i32
    %c0_i32_0 = arith.constant 0 : i32
    %c0_i32_1 = arith.constant 0 : i32
    return %c0_i32, %c0_i32_0 : i32, i32
  }
  func.func @transform_3(%arg0: i32) -> (i32, i32) {
    %c0_i32 = arith.constant 0 : i32
    %c0_i32_0 = arith.constant 0 : i32
    %c0_i32_1 = arith.constant 0 : i32
    return %c0_i32, %c0_i32_0 : i32, i32
  }
  func.func @transform_4(%arg0: i32) -> (i32, i32) {
    %c0_i32 = arith.constant 0 : i32
    %c0_i32_0 = arith.constant 0 : i32
    %c0_i32_1 = arith.constant 0 : i32
    return %c0_i32, %c0_i32_0 : i32, i32
  }
  func.func @transform_5(%arg0: i32) -> (i32, i32) {
    %c0_i32 = arith.constant 0 : i32
    %c0_i32_0 = arith.constant 0 : i32
    %c0_i32_1 = arith.constant 0 : i32
    return %c0_i32, %c0_i32_0 : i32, i32
  }
  func.func @transform_6(%arg0: i32) -> (i32, i32) {
    %c0_i32 = arith.constant 0 : i32
    %c0_i32_0 = arith.constant 0 : i32
    %c0_i32_1 = arith.constant 0 : i32
    return %c0_i32, %c0_i32_0 : i32, i32
  }
  func.func @transform_7(%arg0: i32) -> (i32, i32) {
    %c0_i32 = arith.constant 0 : i32
    %c0_i32_0 = arith.constant 0 : i32
    return %c0_i32, %arg0 : i32, i32
  }
}

</mosaic_0001>

<llo_original>
// kernel: tpu_custom_call.1
$region0: #{tpu_custom_call.1}
  #allocation0 [shape = 'u32[]', space=smem, size = 0x4, offset = 0x4, fixed_abs, tag = 'smem constant byte address 0x4 - core index']
  #allocation1 [shape = 'u32[144,128]{1,0:T(1,128)}', space=vmem, size = 0x12000, scoped, tag = 'internal scratch']
  #allocation2 [shape = 'f32[1,1]{1,0:T(1,128)S(1)}', space=vmem, size = 0x200, scoped, tag = 'scoped memory for tpu_custom_call.1']
  %s0 = inlined_call_operand.vmem [shape: f32[4,128], index: 0, kind: input, shape index: {}]
  %s1 = inlined_call_operand.vmem [shape: f32[24,4], index: 1, kind: input, shape index: {}]
  %s2 = inlined_call_operand.vmem [shape: f32[24,1], index: 2, kind: input, shape index: {}]
  %s3 = inlined_call_operand.vmem [shape: f32[36,24], index: 3, kind: input, shape index: {}]
  %s4 = inlined_call_operand.vmem [shape: f32[36,1], index: 4, kind: input, shape index: {}]
  %s5 = inlined_call_operand.vmem [shape: f32[1,36], index: 5, kind: input, shape index: {}]
  %s6 = inlined_call_operand.<no memory space> [shape: f32[1,1], index: 6, kind: input, shape index: {}]
  %s7 = inlined_call_operand.hbm [shape: f32[1,128], index: 7, kind: output, shape index: {}]
  %s8 = sld [smem:[#allocation0]]
  $region38: #{tpu_custom_call.1} parent=0
    _
  %s10 = ssub.s32 1, %s8
  %s11 = scalar_select 0, %s10, %s8
  %v12 = vstv %s6
  %13 = vst [vmem:[#allocation2] sm:$0x1] %v12
  $region1: #{tpu_custom_call.1} parent=0
    #allocation3 [shape = 'u8[512]{0}', space=vmem, size = 0x400, scoped, tag = 'output window, operand 0, single buffered']
    #allocation4 [shape = 's32[1]{0}', space=sflag, size = 0x4, scoped, tag = 'scoped memory for tpu_custom_call.1']
    %14 = vsyncpa [#allocation4], 0
    // Predicated region
    $region2: #{tpu_custom_call.1} parent=1 // pred_check
      _
    $region3: #{tpu_custom_call.1} parent=1 // pred_check_branch
      %16 = sbr.rel (0) target = $region5
    $region4: #{tpu_custom_call.1} parent=1 // pred_region
      _
    $region5: #{tpu_custom_call.1} parent=1 // pred_fallthru
      _
    // Predicated region
    $region6: #{tpu_custom_call.1} parent=1 // pred_check
      _
    $region7: #{tpu_custom_call.1} parent=1 // pred_check_branch
      %18 = sbr.rel (0) target = $region9
    $region8: #{tpu_custom_call.1} parent=1 // pred_region
      _
    $region9: #{tpu_custom_call.1} parent=1 // pred_fallthru
      _
    // Predicated region
    $region10: #{tpu_custom_call.1} parent=1 // pred_check
      _
    $region11: #{tpu_custom_call.1} parent=1 // pred_check_branch
      %20 = sbr.rel (0) target = $region13
    $region12: #{tpu_custom_call.1} parent=1 // pred_region
      _
    $region13: #{tpu_custom_call.1} parent=1 // pred_fallthru
      _
    // Predicated region
    $region14: #{tpu_custom_call.1} parent=1 // pred_check
      _
    $region15: #{tpu_custom_call.1} parent=1 // pred_check_branch
      %22 = sbr.rel (0) target = $region17
    $region16: #{tpu_custom_call.1} parent=1 // pred_region
      _
    $region17: #{tpu_custom_call.1} parent=1 // pred_fallthru
      _
    // Predicated region
    $region18: #{tpu_custom_call.1} parent=1 // pred_check
      _
    $region19: #{tpu_custom_call.1} parent=1 // pred_check_branch
      %24 = sbr.rel (0) target = $region21
    $region20: #{tpu_custom_call.1} parent=1 // pred_region
      _
    $region21: #{tpu_custom_call.1} parent=1 // pred_fallthru
      _
    // Predicated region
    $region22: #{tpu_custom_call.1} parent=1 // pred_check
      _
    $region23: #{tpu_custom_call.1} parent=1 // pred_check_branch
      %26 = sbr.rel (0) target = $region25
    $region24: #{tpu_custom_call.1} parent=1 // pred_region
      _
    $region25: #{tpu_custom_call.1} parent=1 // pred_fallthru
      _
    // Predicated region
    $region26: #{tpu_custom_call.1} parent=1 // pred_check
      _
    $region27: #{tpu_custom_call.1} parent=1 // pred_check_branch
      %28 = sbr.rel (0) target = $region29
    $region28: #{tpu_custom_call.1} parent=1 // pred_region
      _
    $region29: #{tpu_custom_call.1} parent=1 // pred_fallthru
      _
    %v29 = vld [vmem:[%s0] sm:$0xf]
    %v30 = vld [vmem:[%s1] sm:$0xff]
    %v31 = vld [vmem:[%s1 + $0x8] sm:$0xff]
    %v32 = vld [vmem:[%s1 + $0x10] sm:$0xff]
    %v33 = vld [vmem:[%s2] sm:$0xff]
    %v34 = vld [vmem:[%s2 + $0x8] sm:$0xff]
    %v35 = vld [vmem:[%s2 + $0x10] sm:$0xff]
    %37 = vset.pattern.permute.xlu0 0
    %38 = vperm.xlu0 %37, %v33
    %v39 = vpop.permute.xlu0 %38
    %42 = vset.pattern.permute.xlu0 0
    %43 = vperm.xlu0 %42, %v34
    %v44 = vpop.permute.xlu0 %43
    %47 = vset.pattern.permute.xlu0 0
    %48 = vperm.xlu0 %47, %v35
    %v49 = vpop.permute.xlu0 %48
    %vm51 = vcmask 31744
    %v53 = vsel %vm51, %v30, 0
    %v56 = vsel %vm51, %v31, 0
    %v59 = vsel %vm51, %v32, 0
    %vm61 = vcmask 1043456
    %v63 = vsel %vm61, %v29, 0
    %65 = vmatprep.subr.mxu0 0.0
    %66 = vmatpush1.msra.mxu0 0.0
    %67 = vmatprep.subr.mxu0 0.0
    %68 = vmatpush1.msra.mxu0 0.0
    %69 = vmatprep.subr.mxu0 0.0
    %70 = vmatpush1.msra.mxu0 0.0
    %71 = vmatprep.subr.mxu0 0.0
    %72 = vmatpush1.msra.mxu0 0.0
    %73 = vmatprep.subr.mxu0 0.0
    %74 = vmatpush1.msra.mxu0 0.0
    %75 = vmatprep.subr.mxu0 0.0
    %76 = vmatpush1.msra.mxu0 0.0
    %77 = vmatprep.subr.mxu0 0.0
    %78 = vmatpush1.msra.mxu0 0.0
    %79 = vmatprep.subr.mxu0 0.0
    %80 = vmatpush1.msra.mxu0 0.0
    %81 = vmatprep.subr.mxu0 0.0
    %82 = vmatpush1.msra.mxu0 0.0
    %83 = vmatprep.subr.mxu0 0.0
    %84 = vmatpush1.msra.mxu0 0.0
    %85 = vmatprep.subr.mxu0 0.0
    %86 = vmatpush1.msra.mxu0 0.0
    %87 = vmatprep.subr.mxu0 0.0
    %88 = vmatpush1.msra.mxu0 0.0
    %89 = vmatprep.subr.mxu0 0.0
    %90 = vmatpush1.msra.mxu0 0.0
    %91 = vmatprep.subr.mxu0 0.0
    %92 = vmatpush1.msra.mxu0 0.0
    %93 = vmatprep.subr.mxu0 0.0
    %94 = vmatpush1.msra.mxu0 0.0
    %95 = vmatprep.subr.mxu0 0.0
    %96 = vmatpush1.msra.mxu0 %v63
    %97 = vmatprep.subr.mxu0 0.0
    %98 = vmatpush2.msra.mxu0 0.0
    %99 = vmatprep.subr.mxu0 0.0
    %100 = vmatpush2.msra.mxu0 0.0
    %101 = vmatprep.subr.mxu0 0.0
    %102 = vmatpush2.msra.mxu0 0.0
    %103 = vmatprep.subr.mxu0 0.0
    %104 = vmatpush2.msra.mxu0 0.0
    %105 = vmatprep.subr.mxu0 0.0
    %106 = vmatpush2.msra.mxu0 0.0
    %107 = vmatprep.subr.mxu0 0.0
    %108 = vmatpush2.msra.mxu0 0.0
    %109 = vmatprep.subr.mxu0 0.0
    %110 = vmatpush2.msra.mxu0 0.0
    %111 = vmatprep.subr.mxu0 0.0
    %112 = vmatpush2.msra.mxu0 0.0
    %113 = vmatprep.subr.mxu0 0.0
    %114 = vmatpush2.msra.mxu0 0.0
    %115 = vmatprep.subr.mxu0 0.0
    %116 = vmatpush2.msra.mxu0 0.0
    %117 = vmatprep.subr.mxu0 0.0
    %118 = vmatpush2.msra.mxu0 0.0
    %119 = vmatprep.subr.mxu0 0.0
    %120 = vmatpush2.msra.mxu0 0.0
    %121 = vmatprep.subr.mxu0 0.0
    %122 = vmatpush2.msra.mxu0 0.0
    %123 = vmatprep.subr.mxu0 0.0
    %124 = vmatpush2.msra.mxu0 0.0
    %125 = vmatprep.subr.mxu0 0.0
    %126 = vmatpush2.msra.mxu0 0.0
    %127 = vmatprep.subr.mxu0 0.0
    %128 = vmatpush2.msra.mxu0 0.0
    %129 = vmatprep.mubr.f32.mxu0 0.0
    %130 = vmatmul.mubr.f32.gmra.mxu0 %v53
    %v131 = vpop.f32.mrf.mxu0
    %v132 = vadd.f32 %v39, %v131
    %v133 = vpop.f32.mrf.mxu0
    %134 = vmatprep.mubr.f32.mxu0 0.0
    %135 = vmatmul.mubr.f32.gmra.mxu0 %v56
    %v136 = vpop.f32.mrf.mxu0
    %v137 = vadd.f32 %v44, %v136
    %v138 = vpop.f32.mrf.mxu0
    %139 = vmatprep.mubr.f32.mxu0 0.0
    %140 = vmatmul.mubr.f32.gmra.mxu0 %v59
    %v141 = vpop.f32.mrf.mxu0
    %v142 = vadd.f32 %v49, %v141
    %v143 = vpop.f32.mrf.mxu0
    %144 = vdwg.mxu0
    %v145 = vmax.f32 %v132, 0.0
    %v146 = vmax.f32 %v137, 0.0
    %v147 = vmax.f32 %v142, 0.0
    %v148 = vld [vmem:[%s3] sm:$0xff]
    %v149 = vld [vmem:[%s3 + $0x8] sm:$0xff]
    %v150 = vld [vmem:[%s3 + $0x10] sm:$0xff]
    %v151 = vld [vmem:[%s3 + $0x18] sm:$0xff]
    %v152 = vld [vmem:[%s3 + $0x20] sm:$0xf]
    %v153 = vld [vmem:[%s4] sm:$0xff]
    %v154 = vld [vmem:[%s4 + $0x8] sm:$0xff]
    %v155 = vld [vmem:[%s4 + $0x10] sm:$0xff]
    %v156 = vld [vmem:[%s4 + $0x18] sm:$0xff]
    %v157 = vld [vmem:[%s4 + $0x20] sm:$0xf]
    %159 = vset.pattern.permute.xlu0 0
    %160 = vperm.xlu0 %159, %v153
    %v161 = vpop.permute.xlu0 %160
    %164 = vset.pattern.permute.xlu0 0
    %165 = vperm.xlu0 %164, %v154
    %v166 = vpop.permute.xlu0 %165
    %169 = vset.pattern.permute.xlu0 0
    %170 = vperm.xlu0 %169, %v155
    %v171 = vpop.permute.xlu0 %170
    %174 = vset.pattern.permute.xlu0 0
    %175 = vperm.xlu0 %174, %v156
    %v176 = vpop.permute.xlu0 %175
    %179 = vset.pattern.permute.xlu0 0
    %180 = vperm.xlu0 %179, %v157
    %v181 = vpop.permute.xlu0 %180
    %vm183 = vcmask 195584
    %v185 = vsel %vm183, %v148, 0
    %v188 = vsel %vm183, %v149, 0
    %v191 = vsel %vm183, %v150, 0
    %v194 = vsel %vm183, %v151, 0
    %v197 = vsel %vm183, %v152, 0
    %199 = vmatprep.subr.mxu0 0.0
    %200 = vmatpush1.msra.mxu0 0.0
    %201 = vmatprep.subr.mxu0 0.0
    %202 = vmatpush1.msra.mxu0 0.0
    %203 = vmatprep.subr.mxu0 0.0
    %204 = vmatpush1.msra.mxu0 0.0
    %205 = vmatprep.subr.mxu0 0.0
    %206 = vmatpush1.msra.mxu0 0.0
    %207 = vmatprep.subr.mxu0 0.0
    %208 = vmatpush1.msra.mxu0 0.0
    %209 = vmatprep.subr.mxu0 0.0
    %210 = vmatpush1.msra.mxu0 0.0
    %211 = vmatprep.subr.mxu0 0.0
    %212 = vmatpush1.msra.mxu0 0.0
    %213 = vmatprep.subr.mxu0 0.0
    %214 = vmatpush1.msra.mxu0 0.0
    %215 = vmatprep.subr.mxu0 0.0
    %216 = vmatpush1.msra.mxu0 0.0
    %217 = vmatprep.subr.mxu0 0.0
    %218 = vmatpush1.msra.mxu0 0.0
    %219 = vmatprep.subr.mxu0 0.0
    %220 = vmatpush1.msra.mxu0 0.0
    %221 = vmatprep.subr.mxu0 0.0
    %222 = vmatpush1.msra.mxu0 0.0
    %223 = vmatprep.subr.mxu0 0.0
    %224 = vmatpush1.msra.mxu0 0.0
    %225 = vmatprep.subr.mxu0 0.0
    %226 = vmatpush1.msra.mxu0 %v147
    %227 = vmatprep.subr.mxu0 0.0
    %228 = vmatpush1.msra.mxu0 %v146
    %229 = vmatprep.subr.mxu0 0.0
    %230 = vmatpush1.msra.mxu0 %v145
    %231 = vmatprep.subr.mxu0 0.0
    %232 = vmatpush2.msra.mxu0 0.0
    %233 = vmatprep.subr.mxu0 0.0
    %234 = vmatpush2.msra.mxu0 0.0
    %235 = vmatprep.subr.mxu0 0.0
    %236 = vmatpush2.msra.mxu0 0.0
    %237 = vmatprep.subr.mxu0 0.0
    %238 = vmatpush2.msra.mxu0 0.0
    %239 = vmatprep.subr.mxu0 0.0
    %240 = vmatpush2.msra.mxu0 0.0
    %241 = vmatprep.subr.mxu0 0.0
    %242 = vmatpush2.msra.mxu0 0.0
    %243 = vmatprep.subr.mxu0 0.0
    %244 = vmatpush2.msra.mxu0 0.0
    %245 = vmatprep.subr.mxu0 0.0
    %246 = vmatpush2.msra.mxu0 0.0
    %247 = vmatprep.subr.mxu0 0.0
    %248 = vmatpush2.msra.mxu0 0.0
    %249 = vmatprep.subr.mxu0 0.0
    %250 = vmatpush2.msra.mxu0 0.0
    %251 = vmatprep.subr.mxu0 0.0
    %252 = vmatpush2.msra.mxu0 0.0
    %253 = vmatprep.subr.mxu0 0.0
    %254 = vmatpush2.msra.mxu0 0.0
    %255 = vmatprep.subr.mxu0 0.0
    %256 = vmatpush2.msra.mxu0 0.0
    %257 = vmatprep.subr.mxu0 0.0
    %258 = vmatpush2.msra.mxu0 0.0
    %259 = vmatprep.subr.mxu0 0.0
    %260 = vmatpush2.msra.mxu0 0.0
    %261 = vmatprep.subr.mxu0 0.0
    %262 = vmatpush2.msra.mxu0 0.0
    %263 = vmatprep.mubr.f32.mxu0 0.0
    %264 = vmatmul.mubr.f32.gmra.mxu0 %v185
    %v265 = vpop.f32.mrf.mxu0
    %v266 = vadd.f32 %v161, %v265
    %v267 = vpop.f32.mrf.mxu0
    %268 = vmatprep.mubr.f32.mxu0 0.0
    %269 = vmatmul.mubr.f32.gmra.mxu0 %v188
    %v270 = vpop.f32.mrf.mxu0
    %v271 = vadd.f32 %v166, %v270
    %v272 = vpop.f32.mrf.mxu0
    %273 = vmatprep.mubr.f32.mxu0 0.0
    %274 = vmatmul.mubr.f32.gmra.mxu0 %v191
    %v275 = vpop.f32.mrf.mxu0
    %v276 = vadd.f32 %v171, %v275
    %v277 = vpop.f32.mrf.mxu0
    %278 = vmatprep.mubr.f32.mxu0 0.0
    %279 = vmatmul.mubr.f32.gmra.mxu0 %v194
    %v280 = vpop.f32.mrf.mxu0
    %v281 = vadd.f32 %v176, %v280
    %v282 = vpop.f32.mrf.mxu0
    %283 = vmatprep.mubr.f32.mxu0 0.0
    %284 = vmatmul.mubr.f32.gmra.mxu0 %v197
    %v285 = vpop.f32.mrf.mxu0
    %v286 = vadd.f32 %v181, %v285
    %v287 = vpop.f32.mrf.mxu0
    %288 = vdwg.mxu0
    %v289 = vmax.f32 %v266, 0.0
    %v290 = vmax.f32 %v271, 0.0
    %v291 = vmax.f32 %v276, 0.0
    %v292 = vmax.f32 %v281, 0.0
    %v293 = vmax.f32 %v286, 0.0
    %v294 = vld [vmem:[%s5] sm:$0x1]
    %v295 = vld [vmem:[#allocation2] sm:$0x1]
    %297 = vset.pattern.permute.xlu0 0
    %298 = vperm.xlu0 %297, %v295
    %v299 = vpop.permute.xlu0 %298
    %v301 = vlaneseq
    %v302 = vshrl.u32 %v301, 7
    %v303 = vsub.s32 0, %v302
    %v304 = vrot.slane %v299, %v303
    %vm305 = vcmask 293888
    %v307 = vsel %vm305, %v294, 0
    %v310 = vsel %vm61, %v293, 0
    %312 = vmatprep.subr.mxu0 0.0
    %313 = vmatpush1.msra.mxu0 0.0
    %314 = vmatprep.subr.mxu0 0.0
    %315 = vmatpush1.msra.mxu0 0.0
    %316 = vmatprep.subr.mxu0 0.0
    %317 = vmatpush1.msra.mxu0 0.0
    %318 = vmatprep.subr.mxu0 0.0
    %319 = vmatpush1.msra.mxu0 0.0
    %320 = vmatprep.subr.mxu0 0.0
    %321 = vmatpush1.msra.mxu0 0.0
    %322 = vmatprep.subr.mxu0 0.0
    %323 = vmatpush1.msra.mxu0 0.0
    %324 = vmatprep.subr.mxu0 0.0
    %325 = vmatpush1.msra.mxu0 0.0
    %326 = vmatprep.subr.mxu0 0.0
    %327 = vmatpush1.msra.mxu0 0.0
    %328 = vmatprep.subr.mxu0 0.0
    %329 = vmatpush1.msra.mxu0 0.0
    %330 = vmatprep.subr.mxu0 0.0
    %331 = vmatpush1.msra.mxu0 0.0
    %332 = vmatprep.subr.mxu0 0.0
    %333 = vmatpush1.msra.mxu0 0.0
    %334 = vmatprep.subr.mxu0 0.0
    %335 = vmatpush1.msra.mxu0 %v310
    %336 = vmatprep.subr.mxu0 0.0
    %337 = vmatpush1.msra.mxu0 %v292
    %338 = vmatprep.subr.mxu0 0.0
    %339 = vmatpush1.msra.mxu0 %v291
    %340 = vmatprep.subr.mxu0 0.0
    %341 = vmatpush1.msra.mxu0 %v290
    %342 = vmatprep.subr.mxu0 0.0
    %343 = vmatpush1.msra.mxu0 %v289
    %344 = vmatprep.subr.mxu0 0.0
    %345 = vmatpush2.msra.mxu0 0.0
    %346 = vmatprep.subr.mxu0 0.0
    %347 = vmatpush2.msra.mxu0 0.0
    %348 = vmatprep.subr.mxu0 0.0
    %349 = vmatpush2.msra.mxu0 0.0
    %350 = vmatprep.subr.mxu0 0.0
    %351 = vmatpush2.msra.mxu0 0.0
    %352 = vmatprep.subr.mxu0 0.0
    %353 = vmatpush2.msra.mxu0 0.0
    %354 = vmatprep.subr.mxu0 0.0
    %355 = vmatpush2.msra.mxu0 0.0
    %356 = vmatprep.subr.mxu0 0.0
    %357 = vmatpush2.msra.mxu0 0.0
    %358 = vmatprep.subr.mxu0 0.0
    %359 = vmatpush2.msra.mxu0 0.0
    %360 = vmatprep.subr.mxu0 0.0
    %361 = vmatpush2.msra.mxu0 0.0
    %362 = vmatprep.subr.mxu0 0.0
    %363 = vmatpush2.msra.mxu0 0.0
    %364 = vmatprep.subr.mxu0 0.0
    %365 = vmatpush2.msra.mxu0 0.0
    %366 = vmatprep.subr.mxu0 0.0
    %367 = vmatpush2.msra.mxu0 0.0
    %368 = vmatprep.subr.mxu0 0.0
    %369 = vmatpush2.msra.mxu0 0.0
    %370 = vmatprep.subr.mxu0 0.0
    %371 = vmatpush2.msra.mxu0 0.0
    %372 = vmatprep.subr.mxu0 0.0
    %373 = vmatpush2.msra.mxu0 0.0
    %374 = vmatprep.subr.mxu0 0.0
    %375 = vmatpush2.msra.mxu0 0.0
    %376 = vmatprep.mubr.f32.mxu0 0.0
    %377 = vmatmul.mubr.f32.gmra.mxu0 %v307
    %v378 = vpop.f32.mrf.mxu0
    %v379 = vadd.f32 %v304, %v378
    %v380 = vpop.f32.mrf.mxu0
    %381 = vdwg.mxu0
    %v382 = vxor.u32 %v379, 2147483648
    %v383 = vmul.f32 %v382, 1.442695
    %v384 = vpow.pop %v383
    %v385 = vadd.f32 %v384, 1.0
    %v386 = vrcp.pop %v385
    %v387 = vmul.f32 1.0, %v386
    %388 = vst [vmem:[#allocation3] sm:$0x1] %v387
    // Predicated region
    $region30: #{tpu_custom_call.1} parent=1 // pred_check
      _
    $region31: #{tpu_custom_call.1} parent=1 // pred_check_branch
      %390 = sbr.rel (0) target = $region33
    $region32: #{tpu_custom_call.1} parent=1 // pred_region
      %s392 = ssub.s32 16, 16
      %393 = vsyncadd [#allocation4], %s392
      %s395 = sshll.u32 [#allocation3], 4
      %s396 = int_to_ptr.vmem [resolvable:$true] %s395
      %398 = dma.vmem_to_hbm [thread:$0]  %s396, 16, %s7, [#allocation4]
    $region33: #{tpu_custom_call.1} parent=1 // pred_fallthru
      _
    // Predicated region
    $region34: #{tpu_custom_call.1} parent=1 // pred_check
      _
    $region35: #{tpu_custom_call.1} parent=1 // pred_check_branch
      %400 = sbr.rel (0) target = $region37
    $region36: #{tpu_custom_call.1} parent=1 // pred_region
      %401 = dma.done [#allocation4], 16
    $region37: #{tpu_custom_call.1} parent=1 // pred_fallthru
      _
    %402 = vsyncpa [#allocation4], 1

</llo_original>
